<compile_context>
chip_gen: v6e
topology: v6e:2x2x1
jax: 0.10.0
libtpu: 0.0.40
codegen_flags: <defaults>
</compile_context>

<pallas_src>
import functools

import jax
import jax.numpy as jnp
from jax import lax
from jax.experimental import pallas as pl
from jax.experimental.pallas import tpu as pltpu

# Synthetic, deterministic stand-in for config.TRAIN.EVIDENTIAL_LAMBDA
EVIDENTIAL_LAMBDA = 0.1

_LANES = 128
_MAX_BLOCK_ROWS = 2048   # (2048,128) f32 = 1 MiB per plane


def _cdiv(a, b):
    return -(-a // b)


def _round_up(x, m):
    return (x + m - 1) // m * m


def _num_tensorcores():
    """2 TensorCores/chip on v7x, 1 on earlier generations (best effort)."""
    try:
        kind = jax.devices()[0].device_kind.lower()
    except Exception:
        return 1
    return 2 if ("v7" in kind or "7x" in kind) else 1


def _softplus(x):
    # Hand-rolled softplus: exactly 1 exp + 1 log per element on the EUP.
    # (log(1+y) vs log1p(y) differs by <~1e-7 absolute here, well below tol.)
    return jnp.maximum(x, 0.0) + jnp.log(1.0 + jnp.exp(-jnp.abs(x)))


def _evidential_loss_kernel(ev_ref, tgt_ref, part_ref, acc_ref, *,
                            lam, n_valid, block_rows, inner_steps):
    """Evidential NLL + KL regularizer; per-chunk partial sums to SMEM.

    ev_ref : (2, block_rows, 128)  raw evidential outputs (plane 0 = alpha-raw,
                                   plane 1 = beta-raw)
    tgt_ref: (block_rows, 128)     targets
    part_ref: (1, 1) SMEM          per-chunk scalar partial sum
    acc_ref: (block_rows, 128) VMEM f32 accumulator (persists across steps)
    """
    c = pl.program_id(0)          # parallel chunk axis (v7x megacore)
    i = pl.program_id(1)          # arbitrary reduction axis within a chunk

    @pl.when(i == 0)
    def _():
        acc_ref[...] = jnp.zeros_like(acc_ref)

    e0 = ev_ref[0].astype(jnp.float32)
    e1 = ev_ref[1].astype(jnp.float32)
    tgt = tgt_ref[...].astype(jnp.float32)

    # evidence = softplus(x); alpha/beta = evidence + 1
    alpha = _softplus(e0) + 1.0
    beta = _softplus(e1) + 1.0
    s = alpha + beta

    # EUP approximate reciprocal + one Newton step (VPU filler) -> ~f32 exact.
    inv_s = pl.reciprocal(s, approx=True)
    inv_s = inv_s * (2.0 - s * inv_s)

    # t*(log S - log a) + (1-t)*(log S - log b) == -(t*log(a/S) + (1-t)*log(b/S))
    # -> 2 logs per element instead of 3.
    loss_nll = -(tgt * jnp.log(alpha * inv_s)
                 + (1.0 - tgt) * jnp.log(beta * inv_s))
    # (2 + alpha + beta) / S == 1 + 2/S
    regularizer = 1.0 + 2.0 * inv_s
    loss_kl = jnp.abs(tgt - alpha * inv_s) * regularizer
    loss = loss_nll + lam * loss_kl

    block_elems = block_rows * _LANES
    full_blocks = n_valid // block_elems     # static python ints
    rem = n_valid % block_elems
    block_idx = c * inner_steps + i          # traced scalar

    # Steady-state blocks: plain VPU add, no iota / mask work.
    @pl.when(block_idx < full_blocks)
    def _():
        acc_ref[...] += loss

    # Single partial tail block: mask on a local (in-block) index -> no
    # int32-overflow risk, and jnp.where (not mul) so padding garbage can
    # never poison the accumulator.
    if rem > 0:
        @pl.when(block_idx == full_blocks)
        def _():
            row = lax.broadcasted_iota(jnp.int32, (block_rows, _LANES), 0)
            lane = lax.broadcasted_iota(jnp.int32, (block_rows, _LANES), 1)
            lidx = row * _LANES + lane
            acc_ref[...] += jnp.where(lidx < rem, loss, 0.0)

    @pl.when(i == pl.num_programs(1) - 1)
    def _():
        # One XLU reduce per chunk; scalar partial goes to SMEM.
        part_ref[0, 0] = jnp.sum(acc_ref[...])


def evidential_loss(evidential_output, target,
                    regularizer_weight=EVIDENTIAL_LAMBDA):
    """JAX/Pallas equivalent of EvidentialLoss.forward.

    evidential_output: shape (..., 2), float
    target:            shape (...), float
    returns:           scalar float32 (mean loss)
    """
    assert evidential_output.shape[-1] == 2
    assert evidential_output.shape[:-1] == target.shape

    n = int(target.size)

    # Tiling: lane-dense (rows, 128) planes. Block rows adapt to N so small
    # inputs run a single (tiny) block, large inputs use 2048-row blocks.
    rows_needed = _cdiv(max(n, 1), _LANES)
    block_rows = min(_MAX_BLOCK_ROWS, _round_up(rows_needed, 16))
    blocks_needed = _cdiv(rows_needed, block_rows)
    cores = _num_tensorcores()
    num_chunks = cores if blocks_needed >= cores else 1
    inner_steps = _cdiv(blocks_needed, num_chunks)
    rows_pad = num_chunks * inner_steps * block_rows
    pad_elems = rows_pad * _LANES - n

    # Single-pass prep of the evidential tensor: one read + one write of the
    # interleaved (N,2) buffer, producing a lane-dense (2, rows, 128) slab.
    # (Old version did two strided channel slices, each touching the full
    #  interleaved array.)
    # TODO(synk): fully prep-free variant would deinterleave in-kernel
    # (pltpu.roll even/odd swizzle); on v5e a bf16 prep output would halve
    # kernel-side HBM bytes.
    ev = evidential_output.reshape(-1, 2)
    ev = jnp.pad(ev, ((0, pad_elems), (0, 0)))
    ev = ev.reshape(rows_pad, _LANES, 2)
    ev = jnp.transpose(ev, (2, 0, 1))                     # (2, rows_pad, 128)
    tgt = jnp.pad(target.reshape(-1), (0, pad_elems)).reshape(rows_pad, _LANES)

    kernel = functools.partial(
        _evidential_loss_kernel,
        lam=float(regularizer_weight), n_valid=n,
        block_rows=block_rows, inner_steps=inner_steps)

    ev_spec = pl.BlockSpec((2, block_rows, _LANES),
                           lambda c, i: (0, c * inner_steps + i, 0))
    tg_spec = pl.BlockSpec((block_rows, _LANES),
                           lambda c, i: (c * inner_steps + i, 0))
    out_spec = pl.BlockSpec((1, 1), lambda c, i: (c, 0),
                            memory_space=pltpu.MemorySpace.SMEM)

    partials = pl.pallas_call(
        kernel,
        out_shape=jax.ShapeDtypeStruct((num_chunks, 1), jnp.float32),
        grid_spec=pltpu.PrefetchScalarGridSpec(
            num_scalar_prefetch=0,
            grid=(num_chunks, inner_steps),
            in_specs=[ev_spec, tg_spec],
            out_specs=out_spec,
            scratch_shapes=[pltpu.VMEM((block_rows, _LANES), jnp.float32)],
        ),
        # TODO(synk): confirm in an xprof trace that the chunk axis really
        # splits across both TensorCores on v7x (else switch to CORE_PARALLEL).
        compiler_params=pltpu.CompilerParams(
            dimension_semantics=("parallel", "arbitrary"),
            vmem_limit_bytes=32 * 1024 * 1024),
    )(ev, tgt)

    return jnp.sum(partials) / jnp.float32(n)


def _reference(evidential_output, target, lam=EVIDENTIAL_LAMBDA):
    """Pure-JAX reference mirroring the PyTorch forward exactly."""
    target = target[..., None]
    evidence = jax.nn.softplus(evidential_output)
    alpha = evidence[..., 0:1] + 1.0
    beta = evidence[..., 1:2] + 1.0
    s = alpha + beta
    loss_nll = target * (jnp.log(s) - jnp.log(alpha)) + \
        (1.0 - target) * (jnp.log(s) - jnp.log(beta))
    regularizer = (2.0 + alpha + beta) / s
    loss_kl = jnp.abs(target - alpha / s) * regularizer
    return jnp.mean(loss_nll + lam * loss_kl)


if __name__ == "__main__":
    key = jax.random.PRNGKey(0)
    k1, k2, k3, k4 = jax.random.split(key, 4)

    # Temporal-head style shapes: batch=2, seq=8, 2 evidential channels.
    B, T = 2, 8
    evidential_output = jax.random.normal(k1, (B, T, 2), dtype=jnp.float32)
    target = (jax.random.uniform(k2, (B, T)) > 0.5).astype(jnp.float32)

    loss = evidential_loss(evidential_output, target)
    loss = jax.block_until_ready(loss)
    ref = _reference(evidential_output, target)
    assert jnp.allclose(loss, ref, rtol=1e-4, atol=1e-5), (loss, ref)

    # Second shape: exercises multi-block grid + tail-only masking path.
    B2, T2 = 3, 100_000
    ev2 = jax.random.normal(k3, (B2, T2, 2), dtype=jnp.float32)
    tg2 = jax.random.uniform(k4, (B2, T2), dtype=jnp.float32)
    loss2 = jax.block_until_ready(evidential_loss(ev2, tg2))
    ref2 = _reference(ev2, tg2)
    assert jnp.allclose(loss2, ref2, rtol=1e-4, atol=1e-5), (loss2, ref2)

    print("KERNEL_OK")
</pallas_src>

<mosaic_0001>
module attributes {stable_mosaic.version = 11 : i64} {
  func.func @_evidential_loss_kernel(%arg0: i32, %arg1: i32, %arg2: memref<2x16x128xf32, #tpu.memory_space<vmem>>, %arg3: memref<16x128xf32, #tpu.memory_space<vmem>>, %arg4: memref<1x1xf32, #tpu.memory_space<smem>>, %arg5: memref<16x128xf32, #tpu.memory_space<vmem>>) attributes {dimension_semantics = [#tpu.dimension_semantics<parallel>, #tpu.dimension_semantics<arbitrary>], iteration_bounds = array<i64: 1, 1>, scalar_prefetch = 0 : i64, scratch_operands = 1 : i64, tpu.core_type = #tpu.core_type<tc>, window_params = [{transform_indices = @transform_0, window_bounds = array<i64: 2, 16, 128>}, {transform_indices = @transform_1, window_bounds = array<i64: 16, 128>}, {transform_indices = @transform_2, window_bounds = array<i64: 1, 1>}]} {
    %c0_i32 = arith.constant 0 : i32
    %0 = arith.cmpi eq, %arg1, %c0_i32 : i32
    %1 = arith.extui %0 : i1 to i32
    %c0_i32_0 = arith.constant 0 : i32
    %2 = arith.cmpi ne, %1, %c0_i32_0 : i32
    scf.if %2 {
      %cst_26 = arith.constant 0.000000e+00 : f32
      %71 = vector.broadcast %cst_26 : f32 to vector<16x128xf32>
      %c0_27 = arith.constant 0 : index
      %c0_28 = arith.constant 0 : index
      %72 = vector.load %arg5[%c0_27, %c0_28] : memref<16x128xf32, #tpu.memory_space<vmem>>, vector<16x128xf32>
      tpu.vector_store %arg5[%c0_27, %c0_28], %71 {strides = array<i32>} : memref<16x128xf32, #tpu.memory_space<vmem>>, vector<16x128xf32>,
    } else {
    }
    %c0 = arith.constant 0 : index
    %c0_1 = arith.constant 0 : index
    %c0_2 = arith.constant 0 : index
    %3 = vector.load %arg2[%c0, %c0_1, %c0_2] : memref<2x16x128xf32, #tpu.memory_space<vmem>>, vector<1x16x128xf32>
    %4 = vector.shape_cast %3 : vector<1x16x128xf32> to vector<16x128xf32>
    %c1 = arith.constant 1 : index
    %c0_3 = arith.constant 0 : index
    %c0_4 = arith.constant 0 : index
    %5 = vector.load %arg2[%c1, %c0_3, %c0_4] : memref<2x16x128xf32, #tpu.memory_space<vmem>>, vector<1x16x128xf32>
    %6 = vector.shape_cast %5 : vector<1x16x128xf32> to vector<16x128xf32>
    %c0_5 = arith.constant 0 : index
    %c0_6 = arith.constant 0 : index
    %7 = vector.load %arg3[%c0_5, %c0_6] : memref<16x128xf32, #tpu.memory_space<vmem>>, vector<16x128xf32>
    %cst = arith.constant 0.000000e+00 : f32
    %8 = vector.broadcast %cst : f32 to vector<16x128xf32>
    %9 = arith.maximumf %4, %8 : vector<16x128xf32>
    %10 = math.absf %4 : vector<16x128xf32>
    %cst_7 = arith.constant 0.000000e+00 : f32
    %11 = vector.broadcast %cst_7 : f32 to vector<16x128xf32>
    %12 = arith.subf %11, %10 : vector<16x128xf32>
    %13 = math.exp %12 : vector<16x128xf32>
    %cst_8 = arith.constant 1.000000e+00 : f32
    %14 = vector.broadcast %cst_8 : f32 to vector<16x128xf32>
    %15 = arith.addf %14, %13 : vector<16x128xf32>
    %16 = math.log %15 : vector<16x128xf32>
    %17 = arith.addf %9, %16 : vector<16x128xf32>
    %cst_9 = arith.constant 1.000000e+00 : f32
    %18 = vector.broadcast %cst_9 : f32 to vector<16x128xf32>
    %19 = arith.addf %17, %18 : vector<16x128xf32>
    %cst_10 = arith.constant 0.000000e+00 : f32
    %20 = vector.broadcast %cst_10 : f32 to vector<16x128xf32>
    %21 = arith.maximumf %6, %20 : vector<16x128xf32>
    %22 = math.absf %6 : vector<16x128xf32>
    %cst_11 = arith.constant 0.000000e+00 : f32
    %23 = vector.broadcast %cst_11 : f32 to vector<16x128xf32>
    %24 = arith.subf %23, %22 : vector<16x128xf32>
    %25 = math.exp %24 : vector<16x128xf32>
    %cst_12 = arith.constant 1.000000e+00 : f32
    %26 = vector.broadcast %cst_12 : f32 to vector<16x128xf32>
    %27 = arith.addf %26, %25 : vector<16x128xf32>
    %28 = math.log %27 : vector<16x128xf32>
    %29 = arith.addf %21, %28 : vector<16x128xf32>
    %cst_13 = arith.constant 1.000000e+00 : f32
    %30 = vector.broadcast %cst_13 : f32 to vector<16x128xf32>
    %31 = arith.addf %29, %30 : vector<16x128xf32>
    %32 = arith.addf %19, %31 : vector<16x128xf32>
    %33 = tpu.reciprocal %32 {approx = true} : vector<16x128xf32> -> vector<16x128xf32>
    %34 = arith.mulf %32, %33 : vector<16x128xf32>
    %cst_14 = arith.constant 2.000000e+00 : f32
    %35 = vector.broadcast %cst_14 : f32 to vector<16x128xf32>
    %36 = arith.subf %35, %34 : vector<16x128xf32>
    %37 = arith.mulf %33, %36 : vector<16x128xf32>
    %38 = arith.mulf %19, %37 : vector<16x128xf32>
    %39 = math.log %38 : vector<16x128xf32>
    %40 = arith.mulf %7, %39 : vector<16x128xf32>
    %cst_15 = arith.constant 1.000000e+00 : f32
    %41 = vector.broadcast %cst_15 : f32 to vector<16x128xf32>
    %42 = arith.subf %41, %7 : vector<16x128xf32>
    %43 = arith.mulf %31, %37 : vector<16x128xf32>
    %44 = math.log %43 : vector<16x128xf32>
    %45 = arith.mulf %42, %44 : vector<16x128xf32>
    %46 = arith.addf %40, %45 : vector<16x128xf32>
    %cst_16 = arith.constant 0.000000e+00 : f32
    %47 = vector.broadcast %cst_16 : f32 to vector<16x128xf32>
    %48 = arith.subf %47, %46 : vector<16x128xf32>
    %cst_17 = arith.constant 2.000000e+00 : f32
    %49 = vector.broadcast %cst_17 : f32 to vector<16x128xf32>
    %50 = arith.mulf %49, %37 : vector<16x128xf32>
    %cst_18 = arith.constant 1.000000e+00 : f32
    %51 = vector.broadcast %cst_18 : f32 to vector<16x128xf32>
    %52 = arith.addf %51, %50 : vector<16x128xf32>
    %53 = arith.mulf %19, %37 : vector<16x128xf32>
    %54 = arith.subf %7, %53 : vector<16x128xf32>
    %55 = math.absf %54 : vector<16x128xf32>
    %56 = arith.mulf %55, %52 : vector<16x128xf32>
    %cst_19 = arith.constant 1.000000e-01 : f32
    %57 = vector.broadcast %cst_19 : f32 to vector<16x128xf32>
    %58 = arith.mulf %57, %56 : vector<16x128xf32>
    %59 = arith.addf %48, %58 : vector<16x128xf32>
    %c1_i32 = arith.constant 1 : i32
    %60 = arith.muli %arg0, %c1_i32 : i32
    %61 = arith.addi %60, %arg1 : i32
    %c0_i32_20 = arith.constant 0 : i32
    %62 = arith.cmpi slt, %61, %c0_i32_20 : i32
    %63 = arith.extui %62 : i1 to i32
    %c0_i32_21 = arith.constant 0 : i32
    %64 = arith.cmpi ne, %63, %c0_i32_21 : i32
    scf.if %64 {
      %c0_26 = arith.constant 0 : index
      %c0_27 = arith.constant 0 : index
      %71 = vector.load %arg5[%c0_26, %c0_27] : memref<16x128xf32, #tpu.memory_space<vmem>>, vector<16x128xf32>
      %72 = arith.addf %71, %59 : vector<16x128xf32>
      %c0_28 = arith.constant 0 : index
      %c0_29 = arith.constant 0 : index
      %73 = vector.load %arg5[%c0_28, %c0_29] : memref<16x128xf32, #tpu.memory_space<vmem>>, vector<16x128xf32>
      tpu.vector_store %arg5[%c0_28, %c0_29], %72 {strides = array<i32>} : memref<16x128xf32, #tpu.memory_space<vmem>>, vector<16x128xf32>,
    } else {
    }
    %c0_i32_22 = arith.constant 0 : i32
    %65 = arith.cmpi eq, %61, %c0_i32_22 : i32
    %66 = arith.extui %65 : i1 to i32
    %c0_i32_23 = arith.constant 0 : i32
    %67 = arith.cmpi ne, %66, %c0_i32_23 : i32
    scf.if %67 {
      %71 = tpu.iota {dimensions = array<i32: 0>} : vector<16x128xi32>
      %72 = tpu.iota {dimensions = array<i32: 1>} : vector<16x128xi32>
      %c128_i32 = arith.constant 128 : i32
      %73 = vector.broadcast %c128_i32 : i32 to vector<16x128xi32>
      %74 = arith.muli %71, %73 : vector<16x128xi32>
      %75 = arith.addi %74, %72 : vector<16x128xi32>
      %c0_26 = arith.constant 0 : index
      %c0_27 = arith.constant 0 : index
      %76 = vector.load %arg5[%c0_26, %c0_27] : memref<16x128xf32, #tpu.memory_space<vmem>>, vector<16x128xf32>
      %c16_i32 = arith.constant 16 : i32
      %77 = vector.broadcast %c16_i32 : i32 to vector<16x128xi32>
      %78 = arith.cmpi slt, %75, %77 : vector<16x128xi32>
      %cst_28 = arith.constant 0.000000e+00 : f32
      %79 = vector.broadcast %cst_28 : f32 to vector<16x128xf32>
      %80 = arith.select %78, %59, %79 : vector<16x128xi1>, vector<16x128xf32>
      %81 = arith.addf %76, %80 : vector<16x128xf32>
      %c0_29 = arith.constant 0 : index
      %c0_30 = arith.constant 0 : index
      %82 = vector.load %arg5[%c0_29, %c0_30] : memref<16x128xf32, #tpu.memory_space<vmem>>, vector<16x128xf32>
      tpu.vector_store %arg5[%c0_29, %c0_30], %81 {strides = array<i32>} : memref<16x128xf32, #tpu.memory_space<vmem>>, vector<16x128xf32>,
    } else {
    }
    %c0_i32_24 = arith.constant 0 : i32
    %68 = arith.cmpi eq, %arg1, %c0_i32_24 : i32
    %69 = arith.extui %68 : i1 to i32
    %c0_i32_25 = arith.constant 0 : i32
    %70 = arith.cmpi ne, %69, %c0_i32_25 : i32
    scf.if %70 {
      %c0_26 = arith.constant 0 : index
      %c0_27 = arith.constant 0 : index
      %71 = vector.load %arg5[%c0_26, %c0_27] : memref<16x128xf32, #tpu.memory_space<vmem>>, vector<16x128xf32>
      %72 = vector.shape_cast %71 : vector<16x128xf32> to vector<1x16x128xf32>
      %cst_28 = arith.constant dense<0.000000e+00> : vector<1xf32>
      %73 = vector.multi_reduction <add>, %72, %cst_28 [1, 2] : vector<1x16x128xf32> to vector<1xf32>
      %74 = vector.shape_cast %73 : vector<1xf32> to vector<1x1x1xf32>
      %75 = vector.extract %74[0, 0, 0] : f32 from vector<1x1x1xf32>
      %c0_29 = arith.constant 0 : index
      %c0_30 = arith.constant 0 : index
      %76 = memref.load %arg4[%c0_29, %c0_30] : memref<1x1xf32, #tpu.memory_space<smem>>
      memref.store %75, %arg4[%c0_29, %c0_30] : memref<1x1xf32, #tpu.memory_space<smem>>
    } else {
    }
    return
  }
  func.func @transform_0(%arg0: i32, %arg1: i32) -> (i32, i32, i32) {
    %c1_i32 = arith.constant 1 : i32
    %0 = arith.muli %arg0, %c1_i32 : i32
    %1 = arith.addi %0, %arg1 : i32
    %c0_i32 = arith.constant 0 : i32
    %c0_i32_0 = arith.constant 0 : i32
    %c0_i32_1 = arith.constant 0 : i32
    return %c0_i32, %1, %c0_i32_0 : i32, i32, i32
  }
  func.func @transform_1(%arg0: i32, %arg1: i32) -> (i32, i32) {
    %c1_i32 = arith.constant 1 : i32
    %0 = arith.muli %arg0, %c1_i32 : i32
    %1 = arith.addi %0, %arg1 : i32
    %c0_i32 = arith.constant 0 : i32
    %c0_i32_0 = arith.constant 0 : i32
    return %1, %c0_i32 : i32, i32
  }
  func.func @transform_2(%arg0: i32, %arg1: i32) -> (i32, i32) {
    %c0_i32 = arith.constant 0 : i32
    %c0_i32_0 = arith.constant 0 : i32
    return %arg0, %c0_i32 : i32, i32
  }
}

</mosaic_0001>

<llo_original>
// kernel: tpu_custom_call.1
$region0: #{tpu_custom_call.1}
  #allocation0 [shape = 'u32[]', space=smem, size = 0x4, offset = 0x4, fixed_abs, tag = 'smem constant byte address 0x4 - core index']
  #allocation1 [shape = 'u32[144,128]{1,0:T(1,128)}', space=vmem, size = 0x12000, scoped, tag = 'internal scratch']
  #allocation2 [shape = 'f32[16,128]{1,0:T(8,128)}', space=vmem, size = 0x2000, scoped, tag = 'scratch operand']
  %s0 = inlined_call_operand.hbm [shape: f32[2,16,128], index: 0, kind: input, shape index: {}]
  %s1 = inlined_call_operand.hbm [shape: f32[16,128], index: 1, kind: input, shape index: {}]
  %s2 = inlined_call_operand.hbm [shape: f32[1,1], index: 2, kind: output, shape index: {}]
  %s3 = sld [smem:[#allocation0]]
  $region42: #{tpu_custom_call.1} parent=0
    _
  %s5 = ssub.s32 1, %s3
  %s6 = scalar_select 0, %s5, %s3
  $region1: #{tpu_custom_call.1} parent=0
    #allocation3 [shape = 'u8[16384]{0}', space=vmem, size = 0x4000, scoped, tag = 'input window, operand 0, single buffered']
    #allocation4 [shape = 's32[1]{0}', space=sflag, size = 0x4, scoped, tag = 'scoped memory for tpu_custom_call.1']
    #allocation5 [shape = 's32[1]{0}', space=sflag, size = 0x4, scoped, tag = 'scoped memory for tpu_custom_call.1']
    #allocation6 [shape = 'u8[8192]{0}', space=vmem, size = 0x2000, scoped, tag = 'input window, operand 1, single buffered']
    #allocation7 [shape = 's32[1]{0}', space=sflag, size = 0x4, scoped, tag = 'scoped memory for tpu_custom_call.1']
    #allocation8 [shape = 'u8[512]{0}', space=smem, size = 0x200, scoped, tag = 'output window, operand 0, single buffered']
    %7 = vsyncpa [#allocation4], 0
    %8 = vsyncpa [#allocation7], 0
    %9 = vsyncpa [#allocation5], 0
    // Predicated region
    $region2: #{tpu_custom_call.1} parent=1 // pred_check
      _
    $region3: #{tpu_custom_call.1} parent=1 // pred_check_branch
      %11 = sbr.rel (0) target = $region5
    $region4: #{tpu_custom_call.1} parent=1 // pred_region
      %s12 = sadd.s32 0, 0
      %s13 = smul.u32 2, %s12
      %s15 = ssub.s32 512, 512
      %16 = vsyncadd [#allocation4], %s15
      %s17 = smul.addr %s13, 128
      %s18 = scalar_lea.hbm %s0, %s17
      %s19 = sshll.u32 [#allocation3], 4
      %s20 = int_to_ptr.vmem [resolvable:$true] %s19
      %25 = dma.hbm_to_vmem [thread:$0]  %s18, 512, %s20, [#allocation4], 128, 128, 8
    $region5: #{tpu_custom_call.1} parent=1 // pred_fallthru
      _
    // Predicated region
    $region6: #{tpu_custom_call.1} parent=1 // pred_check
      _
    $region7: #{tpu_custom_call.1} parent=1 // pred_check_branch
      %27 = sbr.rel (0) target = $region9
    $region8: #{tpu_custom_call.1} parent=1 // pred_region
      %s28 = sadd.s32 0, 0
      %s29 = smul.u32 2, %s28
      %s31 = ssub.s32 256, 256
      %32 = vsyncadd [#allocation7], %s31
      %s33 = smul.addr %s29, 128
      %s34 = scalar_lea.hbm %s1, %s33
      %s35 = sshll.u32 [#allocation6], 4
      %s36 = int_to_ptr.vmem [resolvable:$true] %s35
      %41 = dma.hbm_to_vmem [thread:$0]  %s34, 256, %s36, [#allocation7], 128, 128, 8
    $region9: #{tpu_custom_call.1} parent=1 // pred_fallthru
      _
    // Predicated region
    $region10: #{tpu_custom_call.1} parent=1 // pred_check
      _
    $region11: #{tpu_custom_call.1} parent=1 // pred_check_branch
      %43 = sbr.rel (0) target = $region13
    $region12: #{tpu_custom_call.1} parent=1 // pred_region
      %44 = dma.done [#allocation4], 512
    $region13: #{tpu_custom_call.1} parent=1 // pred_fallthru
      _
    // Predicated region
    $region14: #{tpu_custom_call.1} parent=1 // pred_check
      _
    $region15: #{tpu_custom_call.1} parent=1 // pred_check_branch
      %46 = sbr.rel (0) target = $region17
    $region16: #{tpu_custom_call.1} parent=1 // pred_region
      %47 = dma.done [#allocation7], 256
    $region17: #{tpu_custom_call.1} parent=1 // pred_fallthru
      _
    %s48 = sadd.s32 0, 0
    %s49 = smul.u32 2, %s48
    %s50 = sadd.s32 0, 0
    %s51 = smul.u32 2, %s50
    %p52 = scmp.eq.s32.totalorder 0, 0
    // Predicated region
    $region18: #{tpu_custom_call.1} parent=1 // pred_check
      %p53 = pneg %p52
    $region19: #{tpu_custom_call.1} parent=1 // pred_check_branch
      %55 = sbr.rel (%p53) target = $region21
    $region20: #{tpu_custom_call.1} parent=1 // pred_region
      %56 = vst [vmem:[#allocation2] sm:$0xff] 0.0
      %57 = vst [vmem:[#allocation2 + $0x8] sm:$0xff] 0.0
    $region21: #{tpu_custom_call.1} parent=1 // pred_fallthru
      _
    %v58 = vld [vmem:[#allocation3] sm:$0xff]
    %v59 = vld [vmem:[#allocation3 + $0x8] sm:$0xff]
    %s60 = scalar_lea.vmem [#allocation3], 16
    %v61 = vld [vmem:[%s60] sm:$0xff]
    %v62 = vld [vmem:[%s60 + $0x8] sm:$0xff]
    %v63 = vld [vmem:[#allocation6] sm:$0xff]
    %v64 = vld [vmem:[#allocation6 + $0x8] sm:$0xff]
    %v65 = vmax.f32 %v58, 0.0
    %v66 = vmax.f32 %v59, 0.0
    %v67 = vand.u32 2147483647, %v58
    %v68 = vand.u32 2147483647, %v59
    %v69 = vsub.f32 0.0, %v67
    %v70 = vsub.f32 0.0, %v68
    %v71 = vmul.f32 %v69, 1.442695
    %v72 = vpow.pop %v71
    %v73 = vmul.f32 %v70, 1.442695
    %v74 = vpow.pop %v73
    %v75 = vadd.f32 %v72, 1.0
    %v76 = vadd.f32 %v74, 1.0
    %v77 = vlog2.pop %v75
    %v78 = vmul.f32 %v77, 0.6931472
    %v79 = vlog2.pop %v76
    %v80 = vmul.f32 %v79, 0.6931472
    %v81 = vadd.f32 %v65, %v78
    %v82 = vadd.f32 %v66, %v80
    %v83 = vadd.f32 %v81, 1.0
    %v84 = vadd.f32 %v82, 1.0
    %v85 = vmax.f32 %v61, 0.0
    %v86 = vmax.f32 %v62, 0.0
    %v87 = vand.u32 2147483647, %v61
    %v88 = vand.u32 2147483647, %v62
    %v89 = vsub.f32 0.0, %v87
    %v90 = vsub.f32 0.0, %v88
    %v91 = vmul.f32 %v89, 1.442695
    %v92 = vpow.pop %v91
    %v93 = vmul.f32 %v90, 1.442695
    %v94 = vpow.pop %v93
    %v95 = vadd.f32 %v92, 1.0
    %v96 = vadd.f32 %v94, 1.0
    %v97 = vlog2.pop %v95
    %v98 = vmul.f32 %v97, 0.6931472
    %v99 = vlog2.pop %v96
    %v100 = vmul.f32 %v99, 0.6931472
    %v101 = vadd.f32 %v85, %v98
    %v102 = vadd.f32 %v86, %v100
    %v103 = vadd.f32 %v101, 1.0
    %v104 = vadd.f32 %v102, 1.0
    %v105 = vadd.f32 %v83, %v103
    %v106 = vadd.f32 %v84, %v104
    %v107 = vrcp.pop %v105
    %v108 = vrcp.pop %v106
    %v109 = vmul.f32 %v105, %v107
    %v110 = vmul.f32 %v106, %v108
    %v111 = vsub.f32 2.0, %v109
    %v112 = vsub.f32 2.0, %v110
    %v113 = vmul.f32 %v107, %v111
    %v114 = vmul.f32 %v108, %v112
    %v115 = vmul.f32 %v83, %v113
    %v116 = vmul.f32 %v84, %v114
    %v117 = vlog2.pop %v115
    %v118 = vmul.f32 %v117, 0.6931472
    %v119 = vlog2.pop %v116
    %v120 = vmul.f32 %v119, 0.6931472
    %v121 = vmul.f32 %v63, %v118
    %v122 = vmul.f32 %v64, %v120
    %v123 = vsub.f32 1.0, %v63
    %v124 = vsub.f32 1.0, %v64
    %v125 = vmul.f32 %v103, %v113
    %v126 = vmul.f32 %v104, %v114
    %v127 = vlog2.pop %v125
    %v128 = vmul.f32 %v127, 0.6931472
    %v129 = vlog2.pop %v126
    %v130 = vmul.f32 %v129, 0.6931472
    %v131 = vmul.f32 %v123, %v128
    %v132 = vmul.f32 %v124, %v130
    %v133 = vadd.f32 %v121, %v131
    %v134 = vadd.f32 %v122, %v132
    %v135 = vsub.f32 0.0, %v133
    %v136 = vsub.f32 0.0, %v134
    %v137 = vmul.f32 %v113, 2.0
    %v138 = vmul.f32 %v114, 2.0
    %v139 = vadd.f32 %v137, 1.0
    %v140 = vadd.f32 %v138, 1.0
    %v141 = vsub.f32 %v63, %v115
    %v142 = vsub.f32 %v64, %v116
    %v143 = vand.u32 2147483647, %v141
    %v144 = vand.u32 2147483647, %v142
    %v145 = vmul.f32 %v143, %v139
    %v146 = vmul.f32 %v144, %v140
    %v147 = vmul.f32 %v145, 0.1
    %v148 = vmul.f32 %v146, 0.1
    %v149 = vadd.f32 %v135, %v147
    %v150 = vadd.f32 %v136, %v148
    %s151 = sadd.s32 0, 0
    %p152 = scmp.lt.s32.totalorder %s151, 0
    // Predicated region
    $region22: #{tpu_custom_call.1} parent=1 // pred_check
      %p153 = pneg %p152
    $region23: #{tpu_custom_call.1} parent=1 // pred_check_branch
      %155 = sbr.rel (%p153) target = $region25
    $region24: #{tpu_custom_call.1} parent=1 // pred_region
      %v156 = vld [vmem:[#allocation2] sm:$0xff]
      %v157 = vld [vmem:[#allocation2 + $0x8] sm:$0xff]
      %v158 = vadd.f32 %v156, %v149
      %v159 = vadd.f32 %v157, %v150
      %160 = vst [vmem:[#allocation2] sm:$0xff] %v158
      %161 = vst [vmem:[#allocation2 + $0x8] sm:$0xff] %v159
    $region25: #{tpu_custom_call.1} parent=1 // pred_fallthru
      _
    %p162 = scmp.eq.s32.totalorder %s151, 0
    // Predicated region
    $region26: #{tpu_custom_call.1} parent=1 // pred_check
      %p163 = pneg %p162
    $region27: #{tpu_custom_call.1} parent=1 // pred_check_branch
      %165 = sbr.rel (%p163) target = $region29
    $region28: #{tpu_custom_call.1} parent=1 // pred_region
      %v166 = vlaneseq
      %v167 = vshrl.u32 %v166, 7
      %v168 = vadd.s32 %v167, 8
      %v169 = vlaneseq
      %v170 = vand.u32 %v169, 127
      %v171 = vmul.u32 %v167, 128
      %v172 = vmul.u32 %v168, 128
      %v173 = vadd.s32 %v171, %v170
      %v174 = vadd.s32 %v172, %v170
      %v175 = vld [vmem:[#allocation2] sm:$0xff]
      %v176 = vld [vmem:[#allocation2 + $0x8] sm:$0xff]
      %vm177 = vcmp.lt.s32.totalorder %v173, 16
      %vm178 = vcmp.lt.s32.totalorder %v174, 16
      %v179 = vsel %vm177, %v149, 0.0
      %v180 = vsel %vm178, %v150, 0.0
      %v181 = vadd.f32 %v175, %v179
      %v182 = vadd.f32 %v176, %v180
      %183 = vst [vmem:[#allocation2] sm:$0xff] %v181
      %184 = vst [vmem:[#allocation2 + $0x8] sm:$0xff] %v182
    $region29: #{tpu_custom_call.1} parent=1 // pred_fallthru
      _
    // Predicated region
    $region30: #{tpu_custom_call.1} parent=1 // pred_check
      %p185 = pneg %p52
    $region31: #{tpu_custom_call.1} parent=1 // pred_check_branch
      %187 = sbr.rel (%p185) target = $region33
    $region32: #{tpu_custom_call.1} parent=1 // pred_region
      %v188 = vld [vmem:[#allocation2] sm:$0xff]
      %v189 = vld [vmem:[#allocation2 + $0x8] sm:$0xff]
      %v190 = vadd.f32 %v188, %v189
      %191 = vadd.xlane.f32.xlu0 %v190
      %v192 = vpop.xlane.xlu0 %191
      %v193 = vrot.slane %v192, 4
      %v194 = vadd.f32 %v192, %v193
      %v195 = vrot.slane %v194, 2
      %v196 = vadd.f32 %v194, %v195
      %v197 = vrot.slane %v196, 1
      %v198 = vadd.f32 %v196, %v197
      %s199 = vtos %v198
      %s200 = scalar_lea.smem [#allocation8], 0
      %201 = sst [smem:[%s200]] %s199
    $region33: #{tpu_custom_call.1} parent=1 // pred_fallthru
      _
    // Predicated region
    $region34: #{tpu_custom_call.1} parent=1 // pred_check
      _
    $region35: #{tpu_custom_call.1} parent=1 // pred_check_branch
      %203 = sbr.rel (0) target = $region37
    $region36: #{tpu_custom_call.1} parent=1 // pred_region
      %s205 = ssub.s32 16, 16
      %206 = vsyncadd [#allocation5], %s205
      %209 = dma.smem_to_hbm [#allocation8], 16, %s2, [#allocation5]
    $region37: #{tpu_custom_call.1} parent=1 // pred_fallthru
      _
    // Predicated region
    $region38: #{tpu_custom_call.1} parent=1 // pred_check
      _
    $region39: #{tpu_custom_call.1} parent=1 // pred_check_branch
      %211 = sbr.rel (0) target = $region41
    $region40: #{tpu_custom_call.1} parent=1 // pred_region
      %212 = dma.done [#allocation5], 16
    $region41: #{tpu_custom_call.1} parent=1 // pred_fallthru
      _
    %213 = sfence
    %214 = vsyncpa [#allocation4], 1
    %215 = vsyncpa [#allocation7], 1
    %216 = vsyncpa [#allocation5], 1

</llo_original>
